<compile_context>
chip_gen: v6e
topology: v6e:2x2x1
jax: 0.10.0
libtpu: 0.0.40
codegen_flags: <defaults>
</compile_context>

<pallas_src>
import jax
import jax.numpy as jnp
from jax.experimental import pallas as pl
from jax.experimental.pallas import tpu as pltpu

_LANES = 128
_SUBLANES = 8


def _round_up(x, m):
    return (x + m - 1) // m * m


def _similar_loss_kernel(sim_ref, gold_ref, mask_ref, out_ref):
    """One (TILE_B, TILE_M) tile: masked -sim*gold, lane-wise accumulate.

    out_ref: (TILE_B, 128) f32 accumulator, resident across the M grid axis.
    """
    j = pl.program_id(1)

    @pl.when(j == 0)
    def _():
        out_ref[...] = jnp.zeros_like(out_ref)

    sim = sim_ref[...].astype(jnp.float32)    # upcast in-kernel (native dtype in HBM)
    gold = gold_ref[...].astype(jnp.float32)
    keep = mask_ref[...] != 0                 # int8 mask: 1 = keep, 0 = fill with 0
    prod = jnp.where(keep, -sim * gold, 0.0)

    acc = out_ref[...]
    tile_m = prod.shape[-1]
    # Pure-VPU lane-wise accumulation: fold 128-wide, lane-aligned chunks of the
    # tile into the accumulator. The single cross-lane reduction happens once,
    # outside the kernel.
    for c in range(tile_m // _LANES):
        acc = acc + prod[:, c * _LANES:(c + 1) * _LANES]
    out_ref[...] = acc


def similar_loss(similars, gold_labels, memory_mask, reduction="mean",
                 tile_b=256, tile_m=512):
    """Pallas implementation of SimilarLoss.forward.

    similars:     (B, M) float (f32 or bf16 — streamed in native dtype)
    gold_labels:  (B, M) float
    memory_mask:  (B, M) bool
    reduction:    'mean' | 'sum' | anything else -> per-row (B,) loss
    """
    B, M = similars.shape

    # Pad to (8, 128)-aligned shapes; clip tiles to the padded extents.
    b_pad = _round_up(B, _SUBLANES)
    m_pad = _round_up(M, _LANES)
    tile_b = min(tile_b, b_pad)
    tile_m = min(tile_m, m_pad)
    b_pad = _round_up(b_pad, tile_b)
    m_pad = _round_up(m_pad, tile_m)

    mask_i8 = memory_mask.astype(jnp.int8)    # 1 byte/elem of HBM traffic
    if (b_pad, m_pad) != (B, M):
        pad = ((0, b_pad - B), (0, m_pad - M))
        similars = jnp.pad(similars, pad)
        gold_labels = jnp.pad(gold_labels, pad)
        mask_i8 = jnp.pad(mask_i8, pad)       # padded positions masked out -> contribute 0

    grid = (b_pad // tile_b, m_pad // tile_m)

    partial = pl.pallas_call(
        _similar_loss_kernel,
        out_shape=jax.ShapeDtypeStruct((b_pad, _LANES), jnp.float32),
        grid=grid,
        in_specs=[
            pl.BlockSpec((tile_b, tile_m), lambda i, j: (i, j)),
            pl.BlockSpec((tile_b, tile_m), lambda i, j: (i, j)),
            pl.BlockSpec((tile_b, tile_m), lambda i, j: (i, j)),
        ],
        # Lane-dense accumulator output; same block for every j (resident).
        out_specs=pl.BlockSpec((tile_b, _LANES), lambda i, j: (i, 0)),
        compiler_params=pltpu.CompilerParams(
            dimension_semantics=("parallel", "arbitrary")),
    )(similars, gold_labels, mask_i8)

    # Tiny finishing reduction in plain JAX: one cross-lane sum + fused scale.
    row_sums = partial[:B].sum(-1)                 # (B,)
    per_row = row_sums * (1.0 / jnp.float32(M))    # .mean(-1) divides by full M
    if reduction == "sum":
        return per_row.sum()
    if reduction == "mean":
        return per_row.sum() * (1.0 / jnp.float32(B))
    return per_row                                 # reduction == 'none'


def similar_loss_ref(similars, gold_labels, memory_mask, reduction="mean"):
    """Pure-JAX reference for correctness checking."""
    log = -similars.astype(jnp.float32) * gold_labels.astype(jnp.float32)
    masked = jnp.where(memory_mask, log, 0.0)
    loss = masked.mean(-1)
    if reduction == "sum":
        loss = loss.sum(-1)
    if reduction == "mean":
        loss = loss.mean(-1)
    return loss


if __name__ == "__main__":
    key = jax.random.PRNGKey(0)

    # Case 1: small f32 inputs, reduction='mean' (module default).
    k1, k2, k3 = jax.random.split(key, 3)
    B, M = 2, 16
    similars = jax.random.normal(k1, (B, M), dtype=jnp.float32)
    gold_labels = (jax.random.uniform(k2, (B, M)) > 0.5).astype(jnp.float32)
    memory_mask = jax.random.uniform(k3, (B, M)) > 0.3

    out = jax.block_until_ready(similar_loss(similars, gold_labels, memory_mask, "mean"))
    ref = similar_loss_ref(similars, gold_labels, memory_mask, "mean")
    assert jnp.allclose(out, ref, atol=1e-5, rtol=1e-5), (out, ref)

    # Case 2: bf16 inputs, non-tile-aligned shapes (exercises padding),
    # reduction='sum' and reduction='none'.
    k4, k5, k6 = jax.random.split(jax.random.PRNGKey(1), 3)
    B2, M2 = 5, 200
    sim2 = jax.random.normal(k4, (B2, M2), dtype=jnp.bfloat16)
    gold2 = (jax.random.uniform(k5, (B2, M2)) > 0.5).astype(jnp.bfloat16)
    mask2 = jax.random.uniform(k6, (B2, M2)) > 0.3

    out_sum = jax.block_until_ready(similar_loss(sim2, gold2, mask2, "sum"))
    ref_sum = similar_loss_ref(sim2, gold2, mask2, "sum")
    assert jnp.allclose(out_sum, ref_sum, atol=1e-4, rtol=1e-4), (out_sum, ref_sum)

    out_none = jax.block_until_ready(similar_loss(sim2, gold2, mask2, "none"))
    ref_none = similar_loss_ref(sim2, gold2, mask2, "none")
    assert jnp.allclose(out_none, ref_none, atol=1e-4, rtol=1e-4), (out_none, ref_none)

    print("KERNEL_OK")
</pallas_src>

<mosaic_0001>
module attributes {stable_mosaic.version = 11 : i64} {
  func.func @_similar_loss_kernel(%arg0: i32, %arg1: i32, %arg2: memref<8x128xf32, #tpu.memory_space<vmem>>, %arg3: memref<8x128xf32, #tpu.memory_space<vmem>>, %arg4: memref<8x128xi8, #tpu.memory_space<vmem>>, %arg5: memref<8x128xf32, #tpu.memory_space<vmem>>) attributes {dimension_semantics = [#tpu.dimension_semantics<parallel>, #tpu.dimension_semantics<arbitrary>], iteration_bounds = array<i64: 1, 1>, scalar_prefetch = 0 : i64, scratch_operands = 0 : i64, tpu.core_type = #tpu.core_type<tc>, window_params = [{transform_indices = @transform_0, window_bounds = array<i64: 8, 128>}, {transform_indices = @transform_1, window_bounds = array<i64: 8, 128>}, {transform_indices = @transform_2, window_bounds = array<i64: 8, 128>}, {transform_indices = @transform_3, window_bounds = array<i64: 8, 128>}]} {
    %c0_i32 = arith.constant 0 : i32
    %0 = arith.cmpi eq, %arg1, %c0_i32 : i32
    %1 = arith.extui %0 : i1 to i32
    %c0_i32_0 = arith.constant 0 : i32
    %2 = arith.cmpi ne, %1, %c0_i32_0 : i32
    scf.if %2 {
      %cst_11 = arith.constant 0.000000e+00 : f32
      %16 = vector.broadcast %cst_11 : f32 to vector<8x128xf32>
      %c0_12 = arith.constant 0 : index
      %c0_13 = arith.constant 0 : index
      %17 = vector.load %arg5[%c0_12, %c0_13] : memref<8x128xf32, #tpu.memory_space<vmem>>, vector<8x128xf32>
      tpu.vector_store %arg5[%c0_12, %c0_13], %16 {strides = array<i32>} : memref<8x128xf32, #tpu.memory_space<vmem>>, vector<8x128xf32>,
    } else {
    }
    %c0 = arith.constant 0 : index
    %c0_1 = arith.constant 0 : index
    %3 = vector.load %arg2[%c0, %c0_1] : memref<8x128xf32, #tpu.memory_space<vmem>>, vector<8x128xf32>
    %c0_2 = arith.constant 0 : index
    %c0_3 = arith.constant 0 : index
    %4 = vector.load %arg3[%c0_2, %c0_3] : memref<8x128xf32, #tpu.memory_space<vmem>>, vector<8x128xf32>
    %c0_4 = arith.constant 0 : index
    %c0_5 = arith.constant 0 : index
    %5 = vector.load %arg4[%c0_4, %c0_5] : memref<8x128xi8, #tpu.memory_space<vmem>>, vector<8x128xi8>
    %c0_i8 = arith.constant 0 : i8
    %6 = vector.broadcast %c0_i8 : i8 to vector<8x128xi8>
    %7 = arith.cmpi ne, %5, %6 : vector<8x128xi8>
    %cst = arith.constant 0.000000e+00 : f32
    %8 = vector.broadcast %cst : f32 to vector<8x128xf32>
    %9 = arith.subf %8, %3 : vector<8x128xf32>
    %10 = arith.mulf %9, %4 : vector<8x128xf32>
    %cst_6 = arith.constant 0.000000e+00 : f32
    %11 = vector.broadcast %cst_6 : f32 to vector<8x128xf32>
    %12 = arith.select %7, %10, %11 : vector<8x128xi1>, vector<8x128xf32>
    %c0_7 = arith.constant 0 : index
    %c0_8 = arith.constant 0 : index
    %13 = vector.load %arg5[%c0_7, %c0_8] : memref<8x128xf32, #tpu.memory_space<vmem>>, vector<8x128xf32>
    %14 = arith.addf %13, %12 : vector<8x128xf32>
    %c0_9 = arith.constant 0 : index
    %c0_10 = arith.constant 0 : index
    %15 = vector.load %arg5[%c0_9, %c0_10] : memref<8x128xf32, #tpu.memory_space<vmem>>, vector<8x128xf32>
    tpu.vector_store %arg5[%c0_9, %c0_10], %14 {strides = array<i32>} : memref<8x128xf32, #tpu.memory_space<vmem>>, vector<8x128xf32>,
    return
  }
  func.func @transform_0(%arg0: i32, %arg1: i32) -> (i32, i32) {
    %c0_i32 = arith.constant 0 : i32
    return %arg0, %arg1 : i32, i32
  }
  func.func @transform_1(%arg0: i32, %arg1: i32) -> (i32, i32) {
    %c0_i32 = arith.constant 0 : i32
    return %arg0, %arg1 : i32, i32
  }
  func.func @transform_2(%arg0: i32, %arg1: i32) -> (i32, i32) {
    %c0_i32 = arith.constant 0 : i32
    return %arg0, %arg1 : i32, i32
  }
  func.func @transform_3(%arg0: i32, %arg1: i32) -> (i32, i32) {
    %c0_i32 = arith.constant 0 : i32
    %c0_i32_0 = arith.constant 0 : i32
    return %arg0, %c0_i32 : i32, i32
  }
}

</mosaic_0001>

<llo_original>
// kernel: tpu_custom_call.1
$region0: #{tpu_custom_call.1}
  #allocation0 [shape = 'u32[]', space=smem, size = 0x4, offset = 0x4, fixed_abs, tag = 'smem constant byte address 0x4 - core index']
  #allocation1 [shape = 'u32[144,128]{1,0:T(1,128)}', space=vmem, size = 0x12000, scoped, tag = 'internal scratch']
  %s0 = inlined_call_operand.hbm [shape: f32[8,128], index: 0, kind: input, shape index: {}]
  %s1 = inlined_call_operand.hbm [shape: f32[8,128], index: 1, kind: input, shape index: {}]
  %s2 = inlined_call_operand.vmem [shape: s8[8,128], index: 2, kind: input, shape index: {}]
  %s3 = inlined_call_operand.hbm [shape: f32[8,128], index: 3, kind: output, shape index: {}]
  %s4 = sld [smem:[#allocation0]]
  $region34: #{tpu_custom_call.1} parent=0
    _
  %s6 = ssub.s32 1, %s4
  %s7 = scalar_select 0, %s6, %s4
  $region1: #{tpu_custom_call.1} parent=0
    #allocation2 [shape = 'u8[4096]{0}', space=vmem, size = 0x1000, scoped, tag = 'input window, operand 0, single buffered']
    #allocation3 [shape = 's32[1]{0}', space=sflag, size = 0x4, scoped, tag = 'scoped memory for tpu_custom_call.1']
    #allocation4 [shape = 's32[1]{0}', space=sflag, size = 0x4, scoped, tag = 'scoped memory for tpu_custom_call.1']
    #allocation5 [shape = 'u8[4096]{0}', space=vmem, size = 0x1000, scoped, tag = 'input window, operand 1, single buffered']
    #allocation6 [shape = 's32[1]{0}', space=sflag, size = 0x4, scoped, tag = 'scoped memory for tpu_custom_call.1']
    #allocation7 [shape = 'u8[4096]{0}', space=vmem, size = 0x1000, scoped, tag = 'output window, operand 0, single buffered']
    %8 = vsyncpa [#allocation3], 0
    %9 = vsyncpa [#allocation6], 0
    %10 = vsyncpa [#allocation4], 0
    // Predicated region
    $region2: #{tpu_custom_call.1} parent=1 // pred_check
      _
    $region3: #{tpu_custom_call.1} parent=1 // pred_check_branch
      %12 = sbr.rel (0) target = $region5
    $region4: #{tpu_custom_call.1} parent=1 // pred_region
      %s14 = ssub.s32 128, 128
      %15 = vsyncadd [#allocation3], %s14
      %s17 = sshll.u32 [#allocation2], 4
      %s18 = int_to_ptr.vmem [resolvable:$true] %s17
      %20 = dma.hbm_to_vmem [thread:$0]  %s0, 128, %s18, [#allocation3]
    $region5: #{tpu_custom_call.1} parent=1 // pred_fallthru
      _
    // Predicated region
    $region6: #{tpu_custom_call.1} parent=1 // pred_check
      _
    $region7: #{tpu_custom_call.1} parent=1 // pred_check_branch
      %22 = sbr.rel (0) target = $region9
    $region8: #{tpu_custom_call.1} parent=1 // pred_region
      %s24 = ssub.s32 128, 128
      %25 = vsyncadd [#allocation6], %s24
      %s27 = sshll.u32 [#allocation5], 4
      %s28 = int_to_ptr.vmem [resolvable:$true] %s27
      %30 = dma.hbm_to_vmem [thread:$0]  %s1, 128, %s28, [#allocation6]
    $region9: #{tpu_custom_call.1} parent=1 // pred_fallthru
      _
    // Predicated region
    $region10: #{tpu_custom_call.1} parent=1 // pred_check
      _
    $region11: #{tpu_custom_call.1} parent=1 // pred_check_branch
      %32 = sbr.rel (0) target = $region13
    $region12: #{tpu_custom_call.1} parent=1 // pred_region
      _
    $region13: #{tpu_custom_call.1} parent=1 // pred_fallthru
      _
    // Predicated region
    $region14: #{tpu_custom_call.1} parent=1 // pred_check
      _
    $region15: #{tpu_custom_call.1} parent=1 // pred_check_branch
      %34 = sbr.rel (0) target = $region17
    $region16: #{tpu_custom_call.1} parent=1 // pred_region
      %35 = dma.done [#allocation3], 128
    $region17: #{tpu_custom_call.1} parent=1 // pred_fallthru
      _
    // Predicated region
    $region18: #{tpu_custom_call.1} parent=1 // pred_check
      _
    $region19: #{tpu_custom_call.1} parent=1 // pred_check_branch
      %37 = sbr.rel (0) target = $region21
    $region20: #{tpu_custom_call.1} parent=1 // pred_region
      %38 = dma.done [#allocation6], 128
    $region21: #{tpu_custom_call.1} parent=1 // pred_fallthru
      _
    %p41 = scmp.eq.s32.totalorder 0, 0
    // Predicated region
    $region22: #{tpu_custom_call.1} parent=1 // pred_check
      %p42 = pneg %p41
    $region23: #{tpu_custom_call.1} parent=1 // pred_check_branch
      %44 = sbr.rel (%p42) target = $region25
    $region24: #{tpu_custom_call.1} parent=1 // pred_region
      %45 = vst [vmem:[#allocation7] sm:$0xff] 0.0
    $region25: #{tpu_custom_call.1} parent=1 // pred_fallthru
      _
    %v46 = vld [vmem:[#allocation2] sm:$0xff]
    %v47 = vld [vmem:[#allocation5] sm:$0xff]
    %v48 = vld [vmem:[%s2] sm:$0x3]
    %vm49 = vnez %v48
    %v50 = vsub.f32 0.0, %v46
    %v51 = vmul.f32 %v50, %v47
    %v52 = vsel %vm49, 16843009, 0
    %v53 = vunpack.c.0.s8 %v52
    %vm54 = vcmp.ne.s32.totalorder %v53, 0
    %v55 = vsel %vm54, %v51, 0.0
    %v56 = vld [vmem:[#allocation7] sm:$0xff]
    %v57 = vadd.f32 %v56, %v55
    %58 = vst [vmem:[#allocation7] sm:$0xff] %v57
    // Predicated region
    $region26: #{tpu_custom_call.1} parent=1 // pred_check
      _
    $region27: #{tpu_custom_call.1} parent=1 // pred_check_branch
      %60 = sbr.rel (0) target = $region29
    $region28: #{tpu_custom_call.1} parent=1 // pred_region
      %s62 = ssub.s32 128, 128
      %63 = vsyncadd [#allocation4], %s62
      %s65 = sshll.u32 [#allocation7], 4
      %s66 = int_to_ptr.vmem [resolvable:$true] %s65
      %68 = dma.vmem_to_hbm [thread:$0]  %s66, 128, %s3, [#allocation4]
    $region29: #{tpu_custom_call.1} parent=1 // pred_fallthru
      _
    // Predicated region
    $region30: #{tpu_custom_call.1} parent=1 // pred_check
      _
    $region31: #{tpu_custom_call.1} parent=1 // pred_check_branch
      %70 = sbr.rel (0) target = $region33
    $region32: #{tpu_custom_call.1} parent=1 // pred_region
      %71 = dma.done [#allocation4], 128
    $region33: #{tpu_custom_call.1} parent=1 // pred_fallthru
      _
    %72 = vsyncpa [#allocation3], 1
    %73 = vsyncpa [#allocation6], 1
    %74 = vsyncpa [#allocation4], 1

</llo_original>
